<compile_context>
chip_gen: v5e
topology: v5e:2x2
jax: 0.10.0
libtpu: 0.0.40
codegen_flags: <defaults>
</compile_context>

<pallas_src>
import functools

import jax
import jax.numpy as jnp
from jax.experimental import pallas as pl
from jax.experimental.pallas import tpu as pltpu


# ----------------------------------------------------------------------------
# helpers
# ----------------------------------------------------------------------------
def _round_up(v, m):
    return ((v + m - 1) // m) * m


def _window_stack(x, kh, kw, stride, pad_h, pad_w):
    """x: (B,H,W,C) NHWC -> (kh*kw, B*Ho*Wo, C) stacked window slices."""
    B, H, W, C = x.shape
    if pad_h or pad_w:
        x = jnp.pad(x, ((0, 0), (pad_h, pad_h), (pad_w, pad_w), (0, 0)))
    Hp, Wp = H + 2 * pad_h, W + 2 * pad_w
    Ho = (Hp - kh) // stride + 1
    Wo = (Wp - kw) // stride + 1
    slabs = []
    for dy in range(kh):
        for dx in range(kw):
            slabs.append(x[:, dy:dy + (Ho - 1) * stride + 1:stride,
                           dx:dx + (Wo - 1) * stride + 1:stride, :])
    stacked = jnp.stack(slabs, axis=0)               # (P, B, Ho, Wo, C)
    return stacked.reshape(kh * kw, B * Ho * Wo, C), (B, Ho, Wo)


# ----------------------------------------------------------------------------
# fused (matmul + BN scale/shift + optional ReLU) Pallas kernel
# ----------------------------------------------------------------------------
def _matmul_kernel(x_ref, w_ref, scale_ref, shift_ref, o_ref, acc_ref, *, relu):
    @pl.when(pl.program_id(2) == 0)
    def _():
        acc_ref[...] = jnp.zeros_like(acc_ref)

    acc_ref[...] += jnp.dot(x_ref[...], w_ref[...],
                            preferred_element_type=jnp.float32)

    @pl.when(pl.program_id(2) == pl.num_programs(2) - 1)
    def _():
        y = acc_ref[...] * scale_ref[...] + shift_ref[...]
        if relu:
            y = jnp.maximum(y, 0.0)
        o_ref[...] = y


@functools.lru_cache(maxsize=None)
def _build_matmul(Mp, Kp, Np, tm, tk, tn, relu):
    grid = (Mp // tm, Np // tn, Kp // tk)
    w_kwargs = {}
    if grid[2] >= 3:
        # deep-buffer the streamed weight tiles (weight-streaming bound regime)
        w_kwargs["pipeline_mode"] = pl.Buffered(3)
    fn = pl.pallas_call(
        functools.partial(_matmul_kernel, relu=relu),
        out_shape=jax.ShapeDtypeStruct((Mp, Np), jnp.float32),
        grid_spec=pltpu.PrefetchScalarGridSpec(
            num_scalar_prefetch=0,
            grid=grid,
            in_specs=[
                pl.BlockSpec((tm, tk), lambda i, j, k: (i, k)),
                pl.BlockSpec((tk, tn), lambda i, j, k: (k, j), **w_kwargs),
                pl.BlockSpec((1, tn), lambda i, j, k: (0, j)),
                pl.BlockSpec((1, tn), lambda i, j, k: (0, j)),
            ],
            out_specs=pl.BlockSpec((tm, tn), lambda i, j, k: (i, j)),
            scratch_shapes=[pltpu.VMEM((tm, tn), jnp.float32)],
        ),
        compiler_params=pltpu.CompilerParams(
            dimension_semantics=("parallel", "parallel", "arbitrary")),
    )
    return jax.jit(fn)


def _fused_matmul(x, w, scale, shift, relu):
    """x:(M,K) w:(K,N) -> relu((x@w)*scale + shift), f32 output."""
    x = x.astype(jnp.bfloat16)
    w = w.astype(jnp.bfloat16)
    M, K = x.shape
    _, N = w.shape
    Mp = _round_up(M, 32)
    tm = Mp if Mp <= 256 else 256
    Mp = _round_up(Mp, tm)
    Kp = _round_up(K, 128)
    tk = Kp if Kp <= 512 else 512
    Kp = _round_up(Kp, tk)
    Np = _round_up(N, 128)
    tn = 128
    xp = jnp.pad(x, ((0, Mp - M), (0, Kp - K)))
    wp = jnp.pad(w, ((0, Kp - K), (0, Np - N)))
    sp = jnp.pad(scale.astype(jnp.float32), (0, Np - N)).reshape(1, Np)
    bp = jnp.pad(shift.astype(jnp.float32), (0, Np - N)).reshape(1, Np)
    out = _build_matmul(Mp, Kp, Np, tm, tk, tn, bool(relu))(xp, wp, sp, bp)
    return out[:M, :N]


# ----------------------------------------------------------------------------
# window-reduce (max / avg pool) Pallas kernel
# ----------------------------------------------------------------------------
def _pool_kernel(s_ref, o_ref, *, op):
    s = s_ref[...]                        # (P, M, C)
    if op == "max":
        o_ref[...] = jnp.max(s, axis=0)
    else:
        o_ref[...] = jnp.mean(s, axis=0)


@functools.lru_cache(maxsize=None)
def _build_pool(P, Mp, Cp, op):
    fn = pl.pallas_call(
        functools.partial(_pool_kernel, op=op),
        out_shape=jax.ShapeDtypeStruct((Mp, Cp), jnp.float32),
        in_specs=[pl.BlockSpec(memory_space=pltpu.MemorySpace.VMEM)],
        out_specs=pl.BlockSpec(memory_space=pltpu.MemorySpace.VMEM),
    )
    return jax.jit(fn)


def _pool_reduce(stacked, op):
    P, M, C = stacked.shape
    Mp, Cp = _round_up(M, 8), _round_up(C, 128)
    sp = jnp.pad(stacked.astype(jnp.float32),
                 ((0, 0), (0, Mp - M), (0, Cp - C)))
    out = _build_pool(P, Mp, Cp, op)(sp)
    return out[:M, :C]


# ----------------------------------------------------------------------------
# Pallas-backed ops (NHWC)
# ----------------------------------------------------------------------------
def pallas_conv_bn_relu(x, p, kh, kw, stride, ph, pw):
    stacked, (B, Ho, Wo) = _window_stack(x, kh, kw, stride, ph, pw)
    P, M, C = stacked.shape
    patches = jnp.transpose(stacked, (1, 0, 2)).reshape(M, P * C)
    y = _fused_matmul(patches, p["w"], p["scale"], p["shift"], relu=True)
    return y.reshape(B, Ho, Wo, -1)


def pallas_pool2d(x, k, stride, pad, op):
    stacked, (B, Ho, Wo) = _window_stack(x, k, k, stride, pad, pad)
    y = _pool_reduce(stacked, op)
    return y.reshape(B, Ho, Wo, x.shape[-1])


def pallas_global_avg_pool(x):
    B, H, W, C = x.shape
    stacked = jnp.transpose(x, (1, 2, 0, 3)).reshape(H * W, B, C)
    return _pool_reduce(stacked, "mean")          # (B, C)


def pallas_linear(x, p):
    ones = jnp.ones((p["w"].shape[1],), jnp.float32)
    return _fused_matmul(x, p["w"], ones, p["b"], relu=False)


# ----------------------------------------------------------------------------
# pure-JAX reference ops (same arithmetic, used for verification)
# ----------------------------------------------------------------------------
def ref_conv_bn_relu(x, p, kh, kw, stride, ph, pw):
    stacked, (B, Ho, Wo) = _window_stack(x, kh, kw, stride, ph, pw)
    P, M, C = stacked.shape
    patches = jnp.transpose(stacked, (1, 0, 2)).reshape(M, P * C).astype(jnp.bfloat16)
    y = jnp.dot(patches, p["w"].astype(jnp.bfloat16),
                preferred_element_type=jnp.float32)
    y = jnp.maximum(y * p["scale"][None, :] + p["shift"][None, :], 0.0)
    return y.reshape(B, Ho, Wo, -1)


def ref_pool2d(x, k, stride, pad, op):
    stacked, (B, Ho, Wo) = _window_stack(x, k, k, stride, pad, pad)
    y = jnp.max(stacked, axis=0) if op == "max" else jnp.mean(stacked, axis=0)
    return y.reshape(B, Ho, Wo, x.shape[-1])


def ref_global_avg_pool(x):
    return jnp.mean(x, axis=(1, 2))


def ref_linear(x, p):
    y = jnp.dot(x.astype(jnp.bfloat16), p["w"].astype(jnp.bfloat16),
                preferred_element_type=jnp.float32)
    return y + p["b"][None, :]


_PALLAS_OPS = {"conv": pallas_conv_bn_relu, "pool": pallas_pool2d,
               "gap": pallas_global_avg_pool, "linear": pallas_linear}
_REF_OPS = {"conv": ref_conv_bn_relu, "pool": ref_pool2d,
            "gap": ref_global_avg_pool, "linear": ref_linear}


# ----------------------------------------------------------------------------
# Inception3 forward (eval mode), mirrors the PyTorch module structure
# ----------------------------------------------------------------------------
def _inception_a(x, p, conv, pool):
    b1 = conv(x, p["branch1x1"], 1, 1, 1, 0, 0)
    b5 = conv(x, p["branch5x5_1"], 1, 1, 1, 0, 0)
    b5 = conv(b5, p["branch5x5_2"], 5, 5, 1, 2, 2)
    b3 = conv(x, p["branch3x3dbl_1"], 1, 1, 1, 0, 0)
    b3 = conv(b3, p["branch3x3dbl_2"], 3, 3, 1, 1, 1)
    b3 = conv(b3, p["branch3x3dbl_3"], 3, 3, 1, 1, 1)
    bp = pool(x, 3, 1, 1, "avg")
    bp = conv(bp, p["branch_pool"], 1, 1, 1, 0, 0)
    return jnp.concatenate([b1, b5, b3, bp], axis=-1)


def _inception_b(x, p, conv, pool):
    b3 = conv(x, p["branch3x3"], 3, 3, 2, 0, 0)
    bd = conv(x, p["branch3x3dbl_1"], 1, 1, 1, 0, 0)
    bd = conv(bd, p["branch3x3dbl_2"], 3, 3, 1, 1, 1)
    bd = conv(bd, p["branch3x3dbl_3"], 3, 3, 2, 0, 0)
    bp = pool(x, 3, 2, 0, "max")
    return jnp.concatenate([b3, bd, bp], axis=-1)


def _inception_c(x, p, conv, pool):
    b1 = conv(x, p["branch1x1"], 1, 1, 1, 0, 0)
    b7 = conv(x, p["branch7x7_1"], 1, 1, 1, 0, 0)
    b7 = conv(b7, p["branch7x7_2"], 1, 7, 1, 0, 3)
    b7 = conv(b7, p["branch7x7_3"], 7, 1, 1, 3, 0)
    bd = conv(x, p["branch7x7dbl_1"], 1, 1, 1, 0, 0)
    bd = conv(bd, p["branch7x7dbl_2"], 7, 1, 1, 3, 0)
    bd = conv(bd, p["branch7x7dbl_3"], 1, 7, 1, 0, 3)
    bd = conv(bd, p["branch7x7dbl_4"], 7, 1, 1, 3, 0)
    bd = conv(bd, p["branch7x7dbl_5"], 1, 7, 1, 0, 3)
    bp = pool(x, 3, 1, 1, "avg")
    bp = conv(bp, p["branch_pool"], 1, 1, 1, 0, 0)
    return jnp.concatenate([b1, b7, bd, bp], axis=-1)


def _inception_d(x, p, conv, pool):
    b3 = conv(x, p["branch3x3_1"], 1, 1, 1, 0, 0)
    b3 = conv(b3, p["branch3x3_2"], 3, 3, 2, 0, 0)
    b7 = conv(x, p["branch7x7x3_1"], 1, 1, 1, 0, 0)
    b7 = conv(b7, p["branch7x7x3_2"], 1, 7, 1, 0, 3)
    b7 = conv(b7, p["branch7x7x3_3"], 7, 1, 1, 3, 0)
    b7 = conv(b7, p["branch7x7x3_4"], 3, 3, 2, 0, 0)
    bp = pool(x, 3, 2, 0, "max")
    return jnp.concatenate([b3, b7, bp], axis=-1)


def _inception_e(x, p, conv, pool):
    b1 = conv(x, p["branch1x1"], 1, 1, 1, 0, 0)
    b3 = conv(x, p["branch3x3_1"], 1, 1, 1, 0, 0)
    b3 = jnp.concatenate([conv(b3, p["branch3x3_2a"], 1, 3, 1, 0, 1),
                          conv(b3, p["branch3x3_2b"], 3, 1, 1, 1, 0)], axis=-1)
    bd = conv(x, p["branch3x3dbl_1"], 1, 1, 1, 0, 0)
    bd = conv(bd, p["branch3x3dbl_2"], 3, 3, 1, 1, 1)
    bd = jnp.concatenate([conv(bd, p["branch3x3dbl_3a"], 1, 3, 1, 0, 1),
                          conv(bd, p["branch3x3dbl_3b"], 3, 1, 1, 1, 0)], axis=-1)
    bp = pool(x, 3, 1, 1, "avg")
    bp = conv(bp, p["branch_pool"], 1, 1, 1, 0, 0)
    return jnp.concatenate([b1, b3, bd, bp], axis=-1)


def inception3_forward(x_nchw, params, ops):
    conv, pool = ops["conv"], ops["pool"]
    gap, linear = ops["gap"], ops["linear"]
    x = jnp.transpose(x_nchw, (0, 2, 3, 1)).astype(jnp.float32)   # NCHW -> NHWC
    # TODO(synk): transform_input preprocessing omitted (module default False).
    x = conv(x, params["Conv2d_1a_3x3"], 3, 3, 2, 0, 0)
    x = conv(x, params["Conv2d_2a_3x3"], 3, 3, 1, 0, 0)
    x = conv(x, params["Conv2d_2b_3x3"], 3, 3, 1, 1, 1)
    x = pool(x, 3, 2, 0, "max")
    x = conv(x, params["Conv2d_3b_1x1"], 1, 1, 1, 0, 0)
    x = conv(x, params["Conv2d_4a_3x3"], 3, 3, 1, 0, 0)
    x = pool(x, 3, 2, 0, "max")
    x = _inception_a(x, params["Mixed_5b"], conv, pool)
    x = _inception_a(x, params["Mixed_5c"], conv, pool)
    x = _inception_a(x, params["Mixed_5d"], conv, pool)
    x = _inception_b(x, params["Mixed_6a"], conv, pool)
    x = _inception_c(x, params["Mixed_6b"], conv, pool)
    x = _inception_c(x, params["Mixed_6c"], conv, pool)
    x = _inception_c(x, params["Mixed_6d"], conv, pool)
    x = _inception_c(x, params["Mixed_6e"], conv, pool)
    # TODO(synk): InceptionAux branch is training-only; eval forward skips it.
    x = _inception_d(x, params["Mixed_7a"], conv, pool)
    x = _inception_e(x, params["Mixed_7b"], conv, pool)
    x = _inception_e(x, params["Mixed_7c"], conv, pool)
    x = gap(x)                       # adaptive_avg_pool2d(1) + flatten
    # F.dropout is identity in eval mode.
    return linear(x, params["fc"])


# ----------------------------------------------------------------------------
# parameter construction (deterministic random weights, BN at fresh init)
# ----------------------------------------------------------------------------
def init_params(key, num_classes):
    keys = list(jax.random.split(key, 256))
    idx = [0]

    def nk():
        k = keys[idx[0]]
        idx[0] += 1
        return k

    bn_scale = 1.0 / (1.0 + 0.001) ** 0.5    # gamma=1, mean=0, var=1, eps=1e-3

    def conv(cin, cout, kh, kw):
        fan_in = cin * kh * kw
        w = (jax.random.normal(nk(), (fan_in, cout), jnp.float32)
             * (2.0 / fan_in) ** 0.5).astype(jnp.bfloat16)
        return {"w": w,
                "scale": jnp.full((cout,), bn_scale, jnp.float32),
                "shift": jnp.zeros((cout,), jnp.float32)}

    p = {}
    p["Conv2d_1a_3x3"] = conv(3, 32, 3, 3)
    p["Conv2d_2a_3x3"] = conv(32, 32, 3, 3)
    p["Conv2d_2b_3x3"] = conv(32, 64, 3, 3)
    p["Conv2d_3b_1x1"] = conv(64, 80, 1, 1)
    p["Conv2d_4a_3x3"] = conv(80, 192, 3, 3)

    def inc_a(cin, pf):
        return {"branch1x1": conv(cin, 64, 1, 1),
                "branch5x5_1": conv(cin, 48, 1, 1),
                "branch5x5_2": conv(48, 64, 5, 5),
                "branch3x3dbl_1": conv(cin, 64, 1, 1),
                "branch3x3dbl_2": conv(64, 96, 3, 3),
                "branch3x3dbl_3": conv(96, 96, 3, 3),
                "branch_pool": conv(cin, pf, 1, 1)}

    p["Mixed_5b"] = inc_a(192, 32)
    p["Mixed_5c"] = inc_a(256, 64)
    p["Mixed_5d"] = inc_a(288, 64)

    p["Mixed_6a"] = {"branch3x3": conv(288, 384, 3, 3),
                     "branch3x3dbl_1": conv(288, 64, 1, 1),
                     "branch3x3dbl_2": conv(64, 96, 3, 3),
                     "branch3x3dbl_3": conv(96, 96, 3, 3)}

    def inc_c(c7):
        return {"branch1x1": conv(768, 192, 1, 1),
                "branch7x7_1": conv(768, c7, 1, 1),
                "branch7x7_2": conv(c7, c7, 1, 7),
                "branch7x7_3": conv(c7, 192, 7, 1),
                "branch7x7dbl_1": conv(768, c7, 1, 1),
                "branch7x7dbl_2": conv(c7, c7, 7, 1),
                "branch7x7dbl_3": conv(c7, c7, 1, 7),
                "branch7x7dbl_4": conv(c7, c7, 7, 1),
                "branch7x7dbl_5": conv(c7, 192, 1, 7),
                "branch_pool": conv(768, 192, 1, 1)}

    p["Mixed_6b"] = inc_c(128)
    p["Mixed_6c"] = inc_c(160)
    p["Mixed_6d"] = inc_c(160)
    p["Mixed_6e"] = inc_c(192)

    p["Mixed_7a"] = {"branch3x3_1": conv(768, 192, 1, 1),
                     "branch3x3_2": conv(192, 320, 3, 3),
                     "branch7x7x3_1": conv(768, 192, 1, 1),
                     "branch7x7x3_2": conv(192, 192, 1, 7),
                     "branch7x7x3_3": conv(192, 192, 7, 1),
                     "branch7x7x3_4": conv(192, 192, 3, 3)}

    def inc_e(cin):
        return {"branch1x1": conv(cin, 320, 1, 1),
                "branch3x3_1": conv(cin, 384, 1, 1),
                "branch3x3_2a": conv(384, 384, 1, 3),
                "branch3x3_2b": conv(384, 384, 3, 1),
                "branch3x3dbl_1": conv(cin, 448, 1, 1),
                "branch3x3dbl_2": conv(448, 384, 3, 3),
                "branch3x3dbl_3a": conv(384, 384, 1, 3),
                "branch3x3dbl_3b": conv(384, 384, 3, 1),
                "branch_pool": conv(cin, 192, 1, 1)}

    p["Mixed_7b"] = inc_e(1280)
    p["Mixed_7c"] = inc_e(2048)

    p["fc"] = {"w": (jax.random.normal(nk(), (2048, num_classes), jnp.float32)
                     * (1.0 / 2048.0) ** 0.5).astype(jnp.bfloat16),
               "b": jnp.zeros((num_classes,), jnp.float32)}
    return p


# ----------------------------------------------------------------------------
if __name__ == "__main__":
    key = jax.random.PRNGKey(0)
    k_x, k_p = jax.random.split(key)

    # smallest input that flows through all stride-2 valid convs/pools
    B, C, H, W = 2, 3, 75, 75
    NUM_CLASSES = 1000
    x = jax.random.normal(k_x, (B, C, H, W), jnp.float32)
    params = init_params(k_p, NUM_CLASSES)

    out = inception3_forward(x, params, _PALLAS_OPS)
    out = jax.block_until_ready(out)
    assert out.shape == (B, NUM_CLASSES) and out.dtype == jnp.float32

    # cross-check the Pallas pipeline against a pure-JAX reference
    ref_fwd = jax.jit(functools.partial(inception3_forward, ops=_REF_OPS))
    ref = jax.block_until_ready(ref_fwd(x, params))
    rel_err = float(jnp.max(jnp.abs(out - ref)) / (jnp.max(jnp.abs(ref)) + 1e-6))
    assert rel_err < 2e-2, f"mismatch vs reference: rel_err={rel_err}"

    print("KERNEL_OK")
</pallas_src>

<mosaic_0001>
module attributes {stable_mosaic.version = 11 : i64} {
  func.func @_matmul_kernel(%arg0: i32, %arg1: i32, %arg2: i32, %arg3: memref<256x128xbf16, #tpu.memory_space<vmem>>, %arg4: memref<128x128xbf16, #tpu.memory_space<vmem>>, %arg5: memref<1x128xf32, #tpu.memory_space<vmem>>, %arg6: memref<1x128xf32, #tpu.memory_space<vmem>>, %arg7: memref<256x128xf32, #tpu.memory_space<vmem>>, %arg8: memref<256x128xf32, #tpu.memory_space<vmem>>) attributes {dimension_semantics = [#tpu.dimension_semantics<parallel>, #tpu.dimension_semantics<parallel>, #tpu.dimension_semantics<arbitrary>], iteration_bounds = array<i64: 11, 1, 1>, scalar_prefetch = 0 : i64, scratch_operands = 1 : i64, tpu.core_type = #tpu.core_type<tc>, window_params = [{transform_indices = @transform_0, window_bounds = array<i64: 256, 128>}, {transform_indices = @transform_1, window_bounds = array<i64: 128, 128>}, {transform_indices = @transform_2, window_bounds = array<i64: 1, 128>}, {transform_indices = @transform_3, window_bounds = array<i64: 1, 128>}, {transform_indices = @transform_4, window_bounds = array<i64: 256, 128>}]} {
    %c0_i32 = arith.constant 0 : i32
    %0 = arith.cmpi eq, %arg2, %c0_i32 : i32
    %1 = arith.extui %0 : i1 to i32
    %c0_i32_0 = arith.constant 0 : i32
    %2 = arith.cmpi ne, %1, %c0_i32_0 : i32
    scf.if %2 {
      %cst_10 = arith.constant 0.000000e+00 : f32
      %12 = vector.broadcast %cst_10 : f32 to vector<256x128xf32>
      %c0_11 = arith.constant 0 : index
      %c0_12 = arith.constant 0 : index
      %13 = vector.load %arg8[%c0_11, %c0_12] : memref<256x128xf32, #tpu.memory_space<vmem>>, vector<256x128xf32>
      tpu.vector_store %arg8[%c0_11, %c0_12], %12 {strides = array<i32>} : memref<256x128xf32, #tpu.memory_space<vmem>>, vector<256x128xf32>,
    } else {
    }
    %c0 = arith.constant 0 : index
    %c0_1 = arith.constant 0 : index
    %3 = vector.load %arg8[%c0, %c0_1] : memref<256x128xf32, #tpu.memory_space<vmem>>, vector<256x128xf32>
    %c0_2 = arith.constant 0 : index
    %c0_3 = arith.constant 0 : index
    %4 = vector.load %arg3[%c0_2, %c0_3] : memref<256x128xbf16, #tpu.memory_space<vmem>>, vector<256x128xbf16>
    %c0_4 = arith.constant 0 : index
    %c0_5 = arith.constant 0 : index
    %5 = vector.load %arg4[%c0_4, %c0_5] : memref<128x128xbf16, #tpu.memory_space<vmem>>, vector<128x128xbf16>
    %cst = arith.constant dense<0.000000e+00> : vector<256x128xf32>
    %6 = tpu.matmul %4, %5, %cst {dimension_numbers = #tpu.dot_dimension_numbers<[1], [0], [0], [1], [0, 0, 1, 1], [], []>} : vector<256x128xbf16>, vector<128x128xbf16>, vector<256x128xf32> -> vector<256x128xf32>
    %7 = arith.addf %3, %6 : vector<256x128xf32>
    %c0_6 = arith.constant 0 : index
    %c0_7 = arith.constant 0 : index
    %8 = vector.load %arg8[%c0_6, %c0_7] : memref<256x128xf32, #tpu.memory_space<vmem>>, vector<256x128xf32>
    tpu.vector_store %arg8[%c0_6, %c0_7], %7 {strides = array<i32>} : memref<256x128xf32, #tpu.memory_space<vmem>>, vector<256x128xf32>,
    %c0_i32_8 = arith.constant 0 : i32
    %9 = arith.cmpi eq, %arg2, %c0_i32_8 : i32
    %10 = arith.extui %9 : i1 to i32
    %c0_i32_9 = arith.constant 0 : i32
    %11 = arith.cmpi ne, %10, %c0_i32_9 : i32
    scf.if %11 {
      %c0_10 = arith.constant 0 : index
      %c0_11 = arith.constant 0 : index
      %12 = vector.load %arg8[%c0_10, %c0_11] : memref<256x128xf32, #tpu.memory_space<vmem>>, vector<256x128xf32>
      %c0_12 = arith.constant 0 : index
      %c0_13 = arith.constant 0 : index
      %13 = vector.load %arg5[%c0_12, %c0_13] : memref<1x128xf32, #tpu.memory_space<vmem>>, vector<1x128xf32>
      %14 = vector.broadcast %13 : vector<1x128xf32> to vector<256x128xf32>
      %15 = arith.mulf %12, %14 : vector<256x128xf32>
      %c0_14 = arith.constant 0 : index
      %c0_15 = arith.constant 0 : index
      %16 = vector.load %arg6[%c0_14, %c0_15] : memref<1x128xf32, #tpu.memory_space<vmem>>, vector<1x128xf32>
      %17 = vector.broadcast %16 : vector<1x128xf32> to vector<256x128xf32>
      %18 = arith.addf %15, %17 : vector<256x128xf32>
      %cst_16 = arith.constant 0.000000e+00 : f32
      %19 = vector.broadcast %cst_16 : f32 to vector<256x128xf32>
      %20 = arith.maximumf %18, %19 : vector<256x128xf32>
      %c0_17 = arith.constant 0 : index
      %c0_18 = arith.constant 0 : index
      %21 = vector.load %arg7[%c0_17, %c0_18] : memref<256x128xf32, #tpu.memory_space<vmem>>, vector<256x128xf32>
      tpu.vector_store %arg7[%c0_17, %c0_18], %20 {strides = array<i32>} : memref<256x128xf32, #tpu.memory_space<vmem>>, vector<256x128xf32>,
    } else {
    }
    return
  }
  func.func @transform_0(%arg0: i32, %arg1: i32, %arg2: i32) -> (i32, i32) {
    %c0_i32 = arith.constant 0 : i32
    return %arg0, %arg2 : i32, i32
  }
  func.func @transform_1(%arg0: i32, %arg1: i32, %arg2: i32) -> (i32, i32) {
    %c0_i32 = arith.constant 0 : i32
    return %arg2, %arg1 : i32, i32
  }
  func.func @transform_2(%arg0: i32, %arg1: i32, %arg2: i32) -> (i32, i32) {
    %c0_i32 = arith.constant 0 : i32
    %c0_i32_0 = arith.constant 0 : i32
    return %c0_i32, %arg1 : i32, i32
  }
  func.func @transform_3(%arg0: i32, %arg1: i32, %arg2: i32) -> (i32, i32) {
    %c0_i32 = arith.constant 0 : i32
    %c0_i32_0 = arith.constant 0 : i32
    return %c0_i32, %arg1 : i32, i32
  }
  func.func @transform_4(%arg0: i32, %arg1: i32, %arg2: i32) -> (i32, i32) {
    %c0_i32 = arith.constant 0 : i32
    return %arg0, %arg1 : i32, i32
  }
}

</mosaic_0001>

<llo_original>
// kernel: tpu_custom_call.1
$region0: #{tpu_custom_call.1}
  #allocation0 [shape = 'u32[]', space=smem, size = 0x4, offset = 0x4, fixed_abs, tag = 'smem constant byte address 0x4 - core index']
  #allocation1 [shape = 'u32[72,128]{1,0:T(1,128)}', space=vmem, size = 0x9000, scoped, tag = 'internal scratch']
  #allocation2 [shape = 'f32[256,128]{1,0:T(8,128)}', space=vmem, size = 0x20000, scoped, tag = 'scratch operand']
  %s0 = inlined_call_operand.hbm [shape: bf16[2816,128], index: 0, kind: input, shape index: {}]
  %s1 = inlined_call_operand.hbm [shape: bf16[128,128], index: 1, kind: input, shape index: {}]
  %s2 = inlined_call_operand.hbm [shape: f32[1,128], index: 2, kind: input, shape index: {}]
  %s3 = inlined_call_operand.hbm [shape: f32[1,128], index: 3, kind: input, shape index: {}]
  %s4 = inlined_call_operand.hbm [shape: f32[2816,128], index: 4, kind: output, shape index: {}]
  %s5 = sld [smem:[#allocation0]]
  $region73: #{tpu_custom_call.1} parent=0
    _
  %s7 = ssub.s32 1, %s5
  %s8 = scalar_select 0, %s7, %s5
  $region1: #{tpu_custom_call.1} parent=0
    #allocation3 [shape = 'u8[131072]{0}', space=vmem, size = 0x20000, scoped, tag = 'input window, operand 0']
    #allocation4 [shape = 's32[2]{0}', space=sflag, size = 0x8, scoped, tag = 'scoped memory for tpu_custom_call.1']
    #allocation5 [shape = 's32[2]{0}', space=sflag, size = 0x8, scoped, tag = 'scoped memory for tpu_custom_call.1']
    #allocation6 [shape = 'u8[32768]{0}', space=vmem, size = 0x8000, scoped, tag = 'input window, operand 1, single buffered']
    #allocation7 [shape = 's32[1]{0}', space=sflag, size = 0x4, scoped, tag = 'scoped memory for tpu_custom_call.1']
    #allocation8 [shape = 'u8[512]{0}', space=vmem, size = 0x400, scoped, tag = 'input window, operand 2, single buffered']
    #allocation9 [shape = 'u8[512]{0}', space=vmem, size = 0x400, scoped, tag = 'input window, operand 3, single buffered']
    #allocation10 [shape = 's32[1]{0}', space=sflag, size = 0x4, scoped, tag = 'scoped memory for tpu_custom_call.1']
    #allocation11 [shape = 'u8[262144]{0}', space=vmem, size = 0x40000, scoped, tag = 'output window, operand 0']
    %9 = vsyncpa [#allocation4], 0
    %s10 = scalar_lea.sflag [#allocation4], 1
    %11 = vsyncpa %s10, 0
    %12 = vsyncpa [#allocation7], 0
    %13 = vsyncpa [#allocation10], 0
    %14 = vsyncpa [#allocation5], 0
    %s15 = scalar_lea.sflag [#allocation5], 1
    %16 = vsyncpa %s15, 0
    loop: start=0, step=1, limit=13
    $region2: #{tpu_custom_call.1} parent=1 // loop_pre_header
      _
    $region3: #{tpu_custom_call.1} parent=1 // loop_header
      %s18 = sphi 0, %s22
      %p19 = scmp.ge.s32.totalorder %s18, 13
      %s25 = sphi 0, %s44
      %s26 = sphi 0, %s40
      %s27 = sphi 0, %s36
      %s28 = sphi 0, %s25
      %s29 = sphi 0, %s26
      %s30 = sphi 0, %s27
      %s31 = sphi 0, %s28
      %s32 = sphi 0, %s29
      %s33 = sphi 0, %s30
      %s49 = sphi 0, %s51
      %s52 = sphi 0, %s49
      %s53 = sphi 0, %s52
      %s69 = sphi 0, %s53
      %s77 = sphi 0, %s79
      %s80 = sphi 0, %s77
      %s81 = sphi 0, %s80
      %s97 = sphi 0, %s81
      %s103 = sphi 0, %s105
      %s106 = sphi 0, %s103
      %s107 = sphi 0, %s106
      %s123 = sphi 0, %s107
      %s129 = sphi 0, %s131
      %s132 = sphi 0, %s129
      %s133 = sphi 0, %s132
      %s149 = sphi 0, %s133
      %s157 = sphi 0, %s159
      %s160 = sphi 0, %s157
      %s161 = sphi 0, %s160
      %s177 = sphi 0, %s161
    $region4: #{tpu_custom_call.1} parent=1 // loop_header_branch
      %21 = sbr.rel (%p19) target = $region8
    $region5: #{tpu_custom_call.1} parent=1 // loop_body
      %s23 = ssub.s32 %s18, 1
      %s24 = ssub.s32 %s18, 2
      %s34 = sadd.s32 1, %s27
      %p35 = scmp.ge.s32.totalorder %s34, 1
      %s36 = scalar_select %p35, 0, %s34
      %s37 = sadd.s32 1, %s26
      %s38 = scalar_select %p35, %s37, %s26
      %p39 = scmp.ge.s32.totalorder %s38, 1
      %s40 = scalar_select %p39, 0, %s38
      %s41 = sadd.s32 1, %s25
      %s42 = scalar_select %p39, %s41, %s25
      %p43 = scmp.ge.s32.totalorder %s42, 11
      %s44 = scalar_select %p43, 0, %s42
      %s45 = ssub.s32 %s25, %s44
      %s46 = ssub.s32 %s27, %s36
      %s47 = sor.u32 %s45, %s46
      %p48 = scmp.eq.s32.totalorder %s47, 0
      %s50 = sadd.s32 %s49, 1
      %s51 = scalar_select %p48, %s49, %s50
      %p54 = pneg %p48
      %p55 = scmp.eq.s32.totalorder %s18, 10
      %p56 = por %p54, %p55
      %p57 = scmp.ne.s32.totalorder %s49, %s52
      %p58 = scmp.eq.s32.totalorder %s18, 0
      %p59 = por %p57, %p58
      %p60 = scmp.ne.s32.totalorder %s49, %s52
      %p61 = scmp.eq.s32.totalorder %s23, 10
      %p62 = por %p60, %p61
      %p63 = scmp.ne.s32.totalorder %s52, %s53
      %p64 = scmp.eq.s32.totalorder %s23, 0
      %p65 = por %p63, %p64
      %p66 = scmp.ne.s32.totalorder %s52, %s53
      %p67 = scmp.eq.s32.totalorder %s24, 10
      %p68 = por %p66, %p67
      %p70 = scmp.ne.s32.totalorder %s53, %s69
      %p71 = scmp.eq.s32.totalorder %s24, 0
      %p72 = por %p70, %p71
      %s73 = ssub.s32 %s27, %s36
      %s74 = ssub.s32 %s26, %s40
      %s75 = sor.u32 %s73, %s74
      %p76 = scmp.eq.s32.totalorder %s75, 0
      %s78 = sadd.s32 %s77, 1
      %s79 = scalar_select %p76, %s77, %s78
      %p82 = pneg %p76
      %p83 = scmp.eq.s32.totalorder %s18, 10
      %p84 = por %p82, %p83
      %p85 = scmp.ne.s32.totalorder %s77, %s80
      %p86 = scmp.eq.s32.totalorder %s18, 0
      %p87 = por %p85, %p86
      %p88 = scmp.ne.s32.totalorder %s77, %s80
      %p89 = scmp.eq.s32.totalorder %s23, 10
      %p90 = por %p88, %p89
      %p91 = scmp.ne.s32.totalorder %s80, %s81
      %p92 = scmp.eq.s32.totalorder %s23, 0
      %p93 = por %p91, %p92
      %p94 = scmp.ne.s32.totalorder %s80, %s81
      %p95 = scmp.eq.s32.totalorder %s24, 10
      %p96 = por %p94, %p95
      %p98 = scmp.ne.s32.totalorder %s81, %s97
      %p99 = scmp.eq.s32.totalorder %s24, 0
      %p100 = por %p98, %p99
      %s101 = ssub.s32 %s26, %s40
      %p102 = scmp.eq.s32.totalorder %s101, 0
      %s104 = sadd.s32 %s103, 1
      %s105 = scalar_select %p102, %s103, %s104
      %p108 = pneg %p102
      %p109 = scmp.eq.s32.totalorder %s18, 10
      %p110 = por %p108, %p109
      %p111 = scmp.ne.s32.totalorder %s103, %s106
      %p112 = scmp.eq.s32.totalorder %s18, 0
      %p113 = por %p111, %p112
      %p114 = scmp.ne.s32.totalorder %s103, %s106
      %p115 = scmp.eq.s32.totalorder %s23, 10
      %p116 = por %p114, %p115
      %p117 = scmp.ne.s32.totalorder %s106, %s107
      %p118 = scmp.eq.s32.totalorder %s23, 0
      %p119 = por %p117, %p118
      %p120 = scmp.ne.s32.totalorder %s106, %s107
      %p121 = scmp.eq.s32.totalorder %s24, 10
      %p122 = por %p120, %p121
      %p124 = scmp.ne.s32.totalorder %s107, %s123
      %p125 = scmp.eq.s32.totalorder %s24, 0
      %p126 = por %p124, %p125
      %s127 = ssub.s32 %s26, %s40
      %p128 = scmp.eq.s32.totalorder %s127, 0
      %s130 = sadd.s32 %s129, 1
      %s131 = scalar_select %p128, %s129, %s130
      %p134 = pneg %p128
      %p135 = scmp.eq.s32.totalorder %s18, 10
      %p136 = por %p134, %p135
      %p137 = scmp.ne.s32.totalorder %s129, %s132
      %p138 = scmp.eq.s32.totalorder %s18, 0
      %p139 = por %p137, %p138
      %p140 = scmp.ne.s32.totalorder %s129, %s132
      %p141 = scmp.eq.s32.totalorder %s23, 10
      %p142 = por %p140, %p141
      %p143 = scmp.ne.s32.totalorder %s132, %s133
      %p144 = scmp.eq.s32.totalorder %s23, 0
      %p145 = por %p143, %p144
      %p146 = scmp.ne.s32.totalorder %s132, %s133
      %p147 = scmp.eq.s32.totalorder %s24, 10
      %p148 = por %p146, %p147
      %p150 = scmp.ne.s32.totalorder %s133, %s149
      %p151 = scmp.eq.s32.totalorder %s24, 0
      %p152 = por %p150, %p151
      %s153 = ssub.s32 %s25, %s44
      %s154 = ssub.s32 %s26, %s40
      %s155 = sor.u32 %s153, %s154
      %p156 = scmp.eq.s32.totalorder %s155, 0
      %s158 = sadd.s32 %s157, 1
      %s159 = scalar_select %p156, %s157, %s158
      %p162 = pneg %p156
      %p163 = scmp.eq.s32.totalorder %s18, 10
      %p164 = por %p162, %p163
      %p165 = scmp.ne.s32.totalorder %s157, %s160
      %p166 = scmp.eq.s32.totalorder %s18, 0
      %p167 = por %p165, %p166
      %p168 = scmp.ne.s32.totalorder %s157, %s160
      %p169 = scmp.eq.s32.totalorder %s23, 10
      %p170 = por %p168, %p169
      %p171 = scmp.ne.s32.totalorder %s160, %s161
      %p172 = scmp.eq.s32.totalorder %s23, 0
      %p173 = por %p171, %p172
      %p174 = scmp.ne.s32.totalorder %s160, %s161
      %p175 = scmp.eq.s32.totalorder %s24, 10
      %p176 = por %p174, %p175
      %p178 = scmp.ne.s32.totalorder %s161, %s177
      %p179 = scmp.eq.s32.totalorder %s24, 0
      %p180 = por %p178, %p179
      %p181 = scmp.le.s32.totalorder 1, %s18
      %p182 = scmp.lt.s32.totalorder %s18, 12
      %p183 = pnand %p181, %p182
      %p184 = pneg %p183
      // Predicated region
      $region9: #{tpu_custom_call.1} parent=5 // pred_check
        _
      $region10: #{tpu_custom_call.1} parent=5 // pred_check_branch
        %186 = sbr.rel (%p183) target = $region12
      $region11: #{tpu_custom_call.1} parent=5 // pred_region
        %s187 = ssub.s32 %s18, 1
        // Predicated region
        $region13: #{tpu_custom_call.1} parent=11 // pred_check
          %p188 = pneg %p93
        $region14: #{tpu_custom_call.1} parent=11 // pred_check_branch
          %190 = sbr.rel (%p188) target = $region16
        $region15: #{tpu_custom_call.1} parent=11 // pred_region
          %s191 = smul.u32 16, %s30
          %193 = vsyncadd [#allocation7], 0
          %s194 = sadd.s32 %s29, %s191
          %s195 = smul.addr %s194, 4
          %s196 = scalar_lea.hbm %s1, %s195
          %s197 = sshll.u32 %s196, 4
          %s198 = int_to_ptr.hbm [resolvable:$true] %s197
          %s199 = sshll.u32 [#allocation6], 4
          %s200 = int_to_ptr.vmem [resolvable:$true] %s199
          %205 = dma.hbm_to_vmem [thread:$0]  %s198, 1024, %s200, [#allocation7], 64, 64, 4
        $region16: #{tpu_custom_call.1} parent=11 // pred_fallthru
          _
        // Predicated region
        $region17: #{tpu_custom_call.1} parent=11 // pred_check
          %p206 = pneg %p119
        $region18: #{tpu_custom_call.1} parent=11 // pred_check_branch
          %208 = sbr.rel (%p206) target = $region20
        $region19: #{tpu_custom_call.1} parent=11 // pred_region
          %210 = vsyncadd [#allocation7], 0
          %s211 = scalar_lea.hbm %s2, %s29
          %s213 = sshll.u32 %s211, 4
          %s214 = int_to_ptr.hbm [resolvable:$true] %s213
          %s215 = sshll.u32 [#allocation8], 4
          %s216 = int_to_ptr.vmem [resolvable:$true] %s215
          %218 = dma.hbm_to_vmem [thread:$0]  %s214, 16, %s216, [#allocation7]
        $region20: #{tpu_custom_call.1} parent=11 // pred_fallthru
          _
        // Predicated region
        $region21: #{tpu_custom_call.1} parent=11 // pred_check
          %p219 = pneg %p145
        $region22: #{tpu_custom_call.1} parent=11 // pred_check_branch
          %221 = sbr.rel (%p219) target = $region24
        $region23: #{tpu_custom_call.1} parent=11 // pred_region
          %223 = vsyncadd [#allocation10], 0
          %s224 = scalar_lea.hbm %s3, %s29
          %s226 = sshll.u32 %s224, 4
          %s227 = int_to_ptr.hbm [resolvable:$true] %s226
          %s228 = sshll.u32 [#allocation9], 4
          %s229 = int_to_ptr.vmem [resolvable:$true] %s228
          %231 = dma.hbm_to_vmem [thread:$0]  %s227, 16, %s229, [#allocation10]
        $region24: #{tpu_custom_call.1} parent=11 // pred_fallthru
          _
      $region12: #{tpu_custom_call.1} parent=5 // pred_fallthru
        _
      %p232 = scmp.lt.s32.totalorder %s18, 11
      // Predicated region
      $region25: #{tpu_custom_call.1} parent=5 // pred_check
        %p233 = pneg %p232
      $region26: #{tpu_custom_call.1} parent=5 // pred_check_branch
        %235 = sbr.rel (%p233) target = $region28
      $region27: #{tpu_custom_call.1} parent=5 // pred_region
        // Predicated region
        $region29: #{tpu_custom_call.1} parent=27 // pred_check
          %p236 = pneg %p59
        $region30: #{tpu_custom_call.1} parent=27 // pred_check_branch
          %238 = sbr.rel (%p236) target = $region32
        $region31: #{tpu_custom_call.1} parent=27 // pred_region
          %s239 = sand.u32 %s49, 1
          %s240 = scalar_lea.sflag [#allocation4], %s239
          %s241 = sand.u32 %s49, 1
          %s242 = smul.addr %s241, 128
          %s243 = scalar_lea.vmem [#allocation3], %s242
          %s244 = smul.u32 32, %s25
          %246 = vsyncadd %s240, 0
          %s247 = sadd.s32 %s27, %s244
          %s248 = smul.addr %s247, 4
          %s249 = scalar_lea.hbm %s0, %s248
          %s250 = sshll.u32 %s249, 4
          %s251 = int_to_ptr.hbm [resolvable:$true] %s250
          %s252 = sshll.u32 %s243, 4
          %s253 = int_to_ptr.vmem [resolvable:$true] %s252
          %258 = dma.hbm_to_vmem [thread:$0]  %s251, 2048, %s253, %s240, 64, 64, 4
        $region32: #{tpu_custom_call.1} parent=27 // pred_fallthru
          _
      $region28: #{tpu_custom_call.1} parent=5 // pred_fallthru
        _
      %p259 = scmp.le.s32.totalorder 1, %s18
      %p260 = scmp.lt.s32.totalorder %s18, 12
      %p261 = pnand %p259, %p260
      %p262 = pneg %p261
      // Predicated region
      $region33: #{tpu_custom_call.1} parent=5 // pred_check
        _
      $region34: #{tpu_custom_call.1} parent=5 // pred_check_branch
        %264 = sbr.rel (%p261) target = $region36
      $region35: #{tpu_custom_call.1} parent=5 // pred_region
        %s265 = ssub.s32 %s18, 1
        %s266 = sand.u32 %s52, 1
        %s267 = scalar_lea.sflag [#allocation4], %s266
        %s268 = sand.u32 %s52, 1
        %s269 = smul.addr %s268, 128
        %s270 = scalar_lea.vmem [#allocation3], %s269
        // Predicated region
        $region37: #{tpu_custom_call.1} parent=35 // pred_check
          %p271 = pneg %p65
        $region38: #{tpu_custom_call.1} parent=35 // pred_check_branch
          %273 = sbr.rel (%p271) target = $region40
        $region39: #{tpu_custom_call.1} parent=35 // pred_region
          %275 = dma.done %s267, 2048
        $region40: #{tpu_custom_call.1} parent=35 // pred_fallthru
          _
        // Predicated region
        $region41: #{tpu_custom_call.1} parent=35 // pred_check
          %p276 = pneg %p93
        $region42: #{tpu_custom_call.1} parent=35 // pred_check_branch
          %278 = sbr.rel (%p276) target = $region44
        $region43: #{tpu_custom_call.1} parent=35 // pred_region
          %280 = dma.done [#allocation7], 1024
        $region44: #{tpu_custom_call.1} parent=35 // pred_fallthru
          _
        // Predicated region
        $region45: #{tpu_custom_call.1} parent=35 // pred_check
          %p281 = pneg %p119
        $region46: #{tpu_custom_call.1} parent=35 // pred_check_branch
          %283 = sbr.rel (%p281) target = $region48
        $region47: #{tpu_custom_call.1} parent=35 // pred_region
          %285 = dma.done [#allocation7], 16
        $region48: #{tpu_custom_call.1} parent=35 // pred_fallthru
          _
        // Predicated region
        $region49: #{tpu_custom_call.1} parent=35 // pred_check
          %p286 = pneg %p145
        $region50: #{tpu_custom_call.1} parent=35 // pred_check_branch
          %288 = sbr.rel (%p286) target = $region52
        $region51: #{tpu_custom_call.1} parent=35 // pred_region
          %290 = dma.done [#allocation10], 16
        $region52: #{tpu_custom_call.1} parent=35 // pred_fallthru
          _
        %s291 = sand.u32 %s52, 1
        %s292 = scalar_lea.sflag [#allocation4], %s291
        %s293 = sand.u32 %s52, 1
        %s294 = smul.addr %s293, 128
        %s295 = scalar_lea.vmem [#allocation3], %s294
        %p296 = pneg %p65
        %p297 = pneg %p62
        %p298 = pneg %p93
        %p299 = pneg %p90
        %p300 = pneg %p119
        %p301 = pneg %p116
        %p302 = pneg %p145
        %p303 = pneg %p142
        %p304 = pneg %p173
        %p305 = pneg %p170
        %s306 = sand.u32 %s160, 1
        %s307 = scalar_lea.sflag [#allocation5], %s306
        %s308 = sand.u32 %s160, 1
        %s309 = smul.addr %s308, 256
        %s310 = scalar_lea.vmem [#allocation11], %s309
        %s311 = smul.u32 32, %s28
        %s312 = smul.u32 16, %s30
        %s313 = smul.u32 32, %s28
        %p314 = scmp.eq.s32.totalorder %s30, 0
        // Predicated region
        $region53: #{tpu_custom_call.1} parent=35 // pred_check
          %p315 = pneg %p314
        $region54: #{tpu_custom_call.1} parent=35 // pred_check_branch
          %317 = sbr.rel (%p315) target = $region56
        $region55: #{tpu_custom_call.1} parent=35 // pred_region
          %318 = vst [vmem:[#allocation2] sm:$0xff] 0.0
          %319 = vst [vmem:[#allocation2 + $0x8] sm:$0xff] 0.0
          %320 = vst [vmem:[#allocation2 + $0x10] sm:$0xff] 0.0
          %321 = vst [vmem:[#allocation2 + $0x18] sm:$0xff] 0.0
          %322 = vst [vmem:[#allocation2 + $0x20] sm:$0xff] 0.0
          %323 = vst [vmem:[#allocation2 + $0x28] sm:$0xff] 0.0
          %324 = vst [vmem:[#allocation2 + $0x30] sm:$0xff] 0.0
          %325 = vst [vmem:[#allocation2 + $0x38] sm:$0xff] 0.0
          %326 = vst [vmem:[#allocation2 + $0x40] sm:$0xff] 0.0
          %327 = vst [vmem:[#allocation2 + $0x48] sm:$0xff] 0.0
          %328 = vst [vmem:[#allocation2 + $0x50] sm:$0xff] 0.0
          %329 = vst [vmem:[#allocation2 + $0x58] sm:$0xff] 0.0
          %330 = vst [vmem:[#allocation2 + $0x60] sm:$0xff] 0.0
          %331 = vst [vmem:[#allocation2 + $0x68] sm:$0xff] 0.0
          %332 = vst [vmem:[#allocation2 + $0x70] sm:$0xff] 0.0
          %333 = vst [vmem:[#allocation2 + $0x78] sm:$0xff] 0.0
          %334 = vst [vmem:[#allocation2 + $0x80] sm:$0xff] 0.0
          %335 = vst [vmem:[#allocation2 + $0x88] sm:$0xff] 0.0
          %336 = vst [vmem:[#allocation2 + $0x90] sm:$0xff] 0.0
          %337 = vst [vmem:[#allocation2 + $0x98] sm:$0xff] 0.0
          %338 = vst [vmem:[#allocation2 + $0xa0] sm:$0xff] 0.0
          %339 = vst [vmem:[#allocation2 + $0xa8] sm:$0xff] 0.0
          %340 = vst [vmem:[#allocation2 + $0xb0] sm:$0xff] 0.0
          %341 = vst [vmem:[#allocation2 + $0xb8] sm:$0xff] 0.0
          %342 = vst [vmem:[#allocation2 + $0xc0] sm:$0xff] 0.0
          %343 = vst [vmem:[#allocation2 + $0xc8] sm:$0xff] 0.0
          %344 = vst [vmem:[#allocation2 + $0xd0] sm:$0xff] 0.0
          %345 = vst [vmem:[#allocation2 + $0xd8] sm:$0xff] 0.0
          %346 = vst [vmem:[#allocation2 + $0xe0] sm:$0xff] 0.0
          %347 = vst [vmem:[#allocation2 + $0xe8] sm:$0xff] 0.0
          %348 = vst [vmem:[#allocation2 + $0xf0] sm:$0xff] 0.0
          %349 = vst [vmem:[#allocation2 + $0xf8] sm:$0xff] 0.0
        $region56: #{tpu_custom_call.1} parent=35 // pred_fallthru
          _
        %v350 = vld [vmem:[#allocation2] sm:$0xff]
        %v351 = vld [vmem:[#allocation2 + $0x8] sm:$0xff]
        %v352 = vld [vmem:[#allocation2 + $0x10] sm:$0xff]
        %v353 = vld [vmem:[#allocation2 + $0x18] sm:$0xff]
        %v354 = vld [vmem:[#allocation2 + $0x20] sm:$0xff]
        %v355 = vld [vmem:[#allocation2 + $0x28] sm:$0xff]
        %v356 = vld [vmem:[#allocation2 + $0x30] sm:$0xff]
        %v357 = vld [vmem:[#allocation2 + $0x38] sm:$0xff]
        %v358 = vld [vmem:[#allocation2 + $0x40] sm:$0xff]
        %v359 = vld [vmem:[#allocation2 + $0x48] sm:$0xff]
        %v360 = vld [vmem:[#allocation2 + $0x50] sm:$0xff]
        %v361 = vld [vmem:[#allocation2 + $0x58] sm:$0xff]
        %v362 = vld [vmem:[#allocation2 + $0x60] sm:$0xff]
        %v363 = vld [vmem:[#allocation2 + $0x68] sm:$0xff]
        %v364 = vld [vmem:[#allocation2 + $0x70] sm:$0xff]
        %v365 = vld [vmem:[#allocation2 + $0x78] sm:$0xff]
        %v366 = vld [vmem:[#allocation2 + $0x80] sm:$0xff]
        %v367 = vld [vmem:[#allocation2 + $0x88] sm:$0xff]
        %v368 = vld [vmem:[#allocation2 + $0x90] sm:$0xff]
        %v369 = vld [vmem:[#allocation2 + $0x98] sm:$0xff]
        %v370 = vld [vmem:[#allocation2 + $0xa0] sm:$0xff]
        %v371 = vld [vmem:[#allocation2 + $0xa8] sm:$0xff]
        %v372 = vld [vmem:[#allocation2 + $0xb0] sm:$0xff]
        %v373 = vld [vmem:[#allocation2 + $0xb8] sm:$0xff]
        %v374 = vld [vmem:[#allocation2 + $0xc0] sm:$0xff]
        %v375 = vld [vmem:[#allocation2 + $0xc8] sm:$0xff]
        %v376 = vld [vmem:[#allocation2 + $0xd0] sm:$0xff]
        %v377 = vld [vmem:[#allocation2 + $0xd8] sm:$0xff]
        %v378 = vld [vmem:[#allocation2 + $0xe0] sm:$0xff]
        %v379 = vld [vmem:[#allocation2 + $0xe8] sm:$0xff]
        %v380 = vld [vmem:[#allocation2 + $0xf0] sm:$0xff]
        %v381 = vld [vmem:[#allocation2 + $0xf8] sm:$0xff]
        %v382 = vld [vmem:[%s270] sm:$0xf]
        %v383 = vld [vmem:[%s270 + $0x4] sm:$0xf]
        %v384 = vld [vmem:[%s270 + $0x8] sm:$0xf]
        %v385 = vld [vmem:[%s270 + $0xc] sm:$0xf]
        %v386 = vld [vmem:[%s270 + $0x10] sm:$0xf]
        %v387 = vld [vmem:[%s270 + $0x14] sm:$0xf]
        %v388 = vld [vmem:[%s270 + $0x18] sm:$0xf]
        %v389 = vld [vmem:[%s270 + $0x1c] sm:$0xf]
        %v390 = vld [vmem:[%s270 + $0x20] sm:$0xf]
        %v391 = vld [vmem:[%s270 + $0x24] sm:$0xf]
        %v392 = vld [vmem:[%s270 + $0x28] sm:$0xf]
        %v393 = vld [vmem:[%s270 + $0x2c] sm:$0xf]
        %v394 = vld [vmem:[%s270 + $0x30] sm:$0xf]
        %v395 = vld [vmem:[%s270 + $0x34] sm:$0xf]
        %v396 = vld [vmem:[%s270 + $0x38] sm:$0xf]
        %v397 = vld [vmem:[%s270 + $0x3c] sm:$0xf]
        %v398 = vld [vmem:[%s270 + $0x40] sm:$0xf]
        %v399 = vld [vmem:[%s270 + $0x44] sm:$0xf]
        %v400 = vld [vmem:[%s270 + $0x48] sm:$0xf]
        %v401 = vld [vmem:[%s270 + $0x4c] sm:$0xf]
        %v402 = vld [vmem:[%s270 + $0x50] sm:$0xf]
        %v403 = vld [vmem:[%s270 + $0x54] sm:$0xf]
        %v404 = vld [vmem:[%s270 + $0x58] sm:$0xf]
        %v405 = vld [vmem:[%s270 + $0x5c] sm:$0xf]
        %v406 = vld [vmem:[%s270 + $0x60] sm:$0xf]
        %v407 = vld [vmem:[%s270 + $0x64] sm:$0xf]
        %v408 = vld [vmem:[%s270 + $0x68] sm:$0xf]
        %v409 = vld [vmem:[%s270 + $0x6c] sm:$0xf]
        %v410 = vld [vmem:[%s270 + $0x70] sm:$0xf]
        %v411 = vld [vmem:[%s270 + $0x74] sm:$0xf]
        %v412 = vld [vmem:[%s270 + $0x78] sm:$0xf]
        %v413 = vld [vmem:[%s270 + $0x7c] sm:$0xf]
        %v414 = vld [vmem:[#allocation6] sm:$0xf]
        %v415 = vld [vmem:[#allocation6 + $0x4] sm:$0xf]
        %v416 = vld [vmem:[#allocation6 + $0x8] sm:$0xf]
        %v417 = vld [vmem:[#allocation6 + $0xc] sm:$0xf]
        %v418 = vld [vmem:[#allocation6 + $0x10] sm:$0xf]
        %v419 = vld [vmem:[#allocation6 + $0x14] sm:$0xf]
        %v420 = vld [vmem:[#allocation6 + $0x18] sm:$0xf]
        %v421 = vld [vmem:[#allocation6 + $0x1c] sm:$0xf]
        %v422 = vld [vmem:[#allocation6 + $0x20] sm:$0xf]
        %v423 = vld [vmem:[#allocation6 + $0x24] sm:$0xf]
        %v424 = vld [vmem:[#allocation6 + $0x28] sm:$0xf]
        %v425 = vld [vmem:[#allocation6 + $0x2c] sm:$0xf]
        %v426 = vld [vmem:[#allocation6 + $0x30] sm:$0xf]
        %v427 = vld [vmem:[#allocation6 + $0x34] sm:$0xf]
        %v428 = vld [vmem:[#allocation6 + $0x38] sm:$0xf]
        %v429 = vld [vmem:[#allocation6 + $0x3c] sm:$0xf]
        %v462 = vunpack.c.l.b16 %v382
        %v463 = vunpack.c.l.b16 %v383
        %v464 = vunpack.c.l.b16 %v384
        %v465 = vunpack.c.l.b16 %v385
        %v466 = vunpack.c.l.b16 %v386
        %v467 = vunpack.c.l.b16 %v387
        %v468 = vunpack.c.l.b16 %v388
        %v469 = vunpack.c.l.b16 %v389
        %v470 = vunpack.c.l.b16 %v390
        %v471 = vunpack.c.l.b16 %v391
        %v472 = vunpack.c.l.b16 %v392
        %v473 = vunpack.c.l.b16 %v393
        %v474 = vunpack.c.l.b16 %v394
        %v475 = vunpack.c.l.b16 %v395
        %v476 = vunpack.c.l.b16 %v396
        %v477 = vunpack.c.l.b16 %v397
        %v478 = vunpack.c.l.b16 %v398
        %v479 = vunpack.c.l.b16 %v399
        %v480 = vunpack.c.l.b16 %v400
        %v481 = vunpack.c.l.b16 %v401
        %v482 = vunpack.c.l.b16 %v402
        %v483 = vunpack.c.l.b16 %v403
        %v484 = vunpack.c.l.b16 %v404
        %v485 = vunpack.c.l.b16 %v405
        %v486 = vunpack.c.l.b16 %v406
        %v487 = vunpack.c.l.b16 %v407
        %v488 = vunpack.c.l.b16 %v408
        %v489 = vunpack.c.l.b16 %v409
        %v490 = vunpack.c.l.b16 %v410
        %v491 = vunpack.c.l.b16 %v411
        %v492 = vunpack.c.l.b16 %v412
        %v493 = vunpack.c.l.b16 %v413
        %v494 = vpack.c.b16 %v463, %v462
        %v495 = vpack.c.b16 %v465, %v464
        %v496 = vpack.c.b16 %v467, %v466
        %v497 = vpack.c.b16 %v469, %v468
        %v498 = vpack.c.b16 %v471, %v470
        %v499 = vpack.c.b16 %v473, %v472
        %v500 = vpack.c.b16 %v475, %v474
        %v501 = vpack.c.b16 %v477, %v476
        %v502 = vpack.c.b16 %v479, %v478
        %v503 = vpack.c.b16 %v481, %v480
        %v504 = vpack.c.b16 %v483, %v482
        %v505 = vpack.c.b16 %v485, %v484
        %v506 = vpack.c.b16 %v487, %v486
        %v507 = vpack.c.b16 %v489, %v488
        %v508 = vpack.c.b16 %v491, %v490
        %v509 = vpack.c.b16 %v493, %v492
        %v542 = vunpack.c.l.b16 %v414
        %v543 = vunpack.c.l.b16 %v415
        %v544 = vunpack.c.l.b16 %v416
        %v545 = vunpack.c.l.b16 %v417
        %v546 = vunpack.c.l.b16 %v418
        %v547 = vunpack.c.l.b16 %v419
        %v548 = vunpack.c.l.b16 %v420
        %v549 = vunpack.c.l.b16 %v421
        %v550 = vunpack.c.l.b16 %v422
        %v551 = vunpack.c.l.b16 %v423
        %v552 = vunpack.c.l.b16 %v424
        %v553 = vunpack.c.l.b16 %v425
        %v554 = vunpack.c.l.b16 %v426
        %v555 = vunpack.c.l.b16 %v427
        %v556 = vunpack.c.l.b16 %v428
        %v557 = vunpack.c.l.b16 %v429
        %v558 = vpack.c.b16 %v543, %v542
        %v559 = vpack.c.b16 %v545, %v544
        %v560 = vpack.c.b16 %v547, %v546
        %v561 = vpack.c.b16 %v549, %v548
        %v562 = vpack.c.b16 %v551, %v550
        %v563 = vpack.c.b16 %v553, %v552
        %v564 = vpack.c.b16 %v555, %v554
        %v565 = vpack.c.b16 %v557, %v556
        %574 = vmatpush.bf16.msra.mxu0 %v565
        %575 = vmatpush.bf16.msra.mxu0 %v564
        %576 = vmatpush.bf16.msra.mxu0 %v563
        %577 = vmatpush.bf16.msra.mxu0 %v562
        %578 = vmatpush.bf16.msra.mxu0 %v561
        %579 = vmatpush.bf16.msra.mxu0 %v560
        %580 = vmatpush.bf16.msra.mxu0 %v559
        %581 = vmatpush.bf16.msra.mxu0 %v558
        %582 = vmatmul.bf16.gmra.mxu0 %v494
        %v583 = vpop.f32.mrf.mxu0
        %v584 = vadd.f32 0.0, %v583
        %v585 = vpop.f32.mrf.mxu0
        %v586 = vadd.f32 0.0, %v585
        %587 = vmatmul.bf16.gmra.mxu0 %v495
        %v588 = vpop.f32.mrf.mxu0
        %v589 = vadd.f32 0.0, %v588
        %v590 = vpop.f32.mrf.mxu0
        %v591 = vadd.f32 0.0, %v590
        %592 = vmatmul.bf16.gmra.mxu0 %v496
        %v593 = vpop.f32.mrf.mxu0
        %v594 = vadd.f32 0.0, %v593
        %v595 = vpop.f32.mrf.mxu0
        %v596 = vadd.f32 0.0, %v595
        %597 = vmatmul.bf16.gmra.mxu0 %v497
        %v598 = vpop.f32.mrf.mxu0
        %v599 = vadd.f32 0.0, %v598
        %v600 = vpop.f32.mrf.mxu0
        %v601 = vadd.f32 0.0, %v600
        %602 = vmatmul.bf16.gmra.mxu0 %v498
        %v603 = vpop.f32.mrf.mxu0
        %v604 = vadd.f32 0.0, %v603
        %v605 = vpop.f32.mrf.mxu0
        %v606 = vadd.f32 0.0, %v605
        %607 = vmatmul.bf16.gmra.mxu0 %v499
        %v608 = vpop.f32.mrf.mxu0
        %v609 = vadd.f32 0.0, %v608
        %v610 = vpop.f32.mrf.mxu0
        %v611 = vadd.f32 0.0, %v610
        %612 = vmatmul.bf16.gmra.mxu0 %v500
        %v613 = vpop.f32.mrf.mxu0
        %v614 = vadd.f32 0.0, %v613
        %v615 = vpop.f32.mrf.mxu0
        %v616 = vadd.f32 0.0, %v615
        %617 = vmatmul.bf16.gmra.mxu0 %v501
        %v618 = vpop.f32.mrf.mxu0
        %v619 = vadd.f32 0.0, %v618
        %v620 = vpop.f32.mrf.mxu0
        %v621 = vadd.f32 0.0, %v620
        %622 = vmatmul.bf16.gmra.mxu0 %v502
        %v623 = vpop.f32.mrf.mxu0
        %v624 = vadd.f32 0.0, %v623
        %v625 = vpop.f32.mrf.mxu0
        %v626 = vadd.f32 0.0, %v625
        %627 = vmatmul.bf16.gmra.mxu0 %v503
        %v628 = vpop.f32.mrf.mxu0
        %v629 = vadd.f32 0.0, %v628
        %v630 = vpop.f32.mrf.mxu0
        %v631 = vadd.f32 0.0, %v630
        %632 = vmatmul.bf16.gmra.mxu0 %v504
        %v633 = vpop.f32.mrf.mxu0
        %v634 = vadd.f32 0.0, %v633
        %v635 = vpop.f32.mrf.mxu0
        %v636 = vadd.f32 0.0, %v635
        %637 = vmatmul.bf16.gmra.mxu0 %v505
        %v638 = vpop.f32.mrf.mxu0
        %v639 = vadd.f32 0.0, %v638
        %v640 = vpop.f32.mrf.mxu0
        %v641 = vadd.f32 0.0, %v640
        %642 = vmatmul.bf16.gmra.mxu0 %v506
        %v643 = vpop.f32.mrf.mxu0
        %v644 = vadd.f32 0.0, %v643
        %v645 = vpop.f32.mrf.mxu0
        %v646 = vadd.f32 0.0, %v645
        %647 = vmatmul.bf16.gmra.mxu0 %v507
        %v648 = vpop.f32.mrf.mxu0
        %v649 = vadd.f32 0.0, %v648
        %v650 = vpop.f32.mrf.mxu0
        %v651 = vadd.f32 0.0, %v650
        %652 = vmatmul.bf16.gmra.mxu0 %v508
        %v653 = vpop.f32.mrf.mxu0
        %v654 = vadd.f32 0.0, %v653
        %v655 = vpop.f32.mrf.mxu0
        %v656 = vadd.f32 0.0, %v655
        %657 = vmatmul.bf16.gmra.mxu0 %v509
        %v658 = vpop.f32.mrf.mxu0
        %v659 = vadd.f32 0.0, %v658
        %v660 = vpop.f32.mrf.mxu0
        %v661 = vadd.f32 0.0, %v660
        %662 = vdwg.mxu0
        %v663 = vadd.f32 %v350, %v584
        %v664 = vadd.f32 %v351, %v586
        %v665 = vadd.f32 %v352, %v589
        %v666 = vadd.f32 %v353, %v591
        %v667 = vadd.f32 %v354, %v594
        %v668 = vadd.f32 %v355, %v596
        %v669 = vadd.f32 %v356, %v599
        %v670 = vadd.f32 %v357, %v601
        %v671 = vadd.f32 %v358, %v604
        %v672 = vadd.f32 %v359, %v606
        %v673 = vadd.f32 %v360, %v609
        %v674 = vadd.f32 %v361, %v611
        %v675 = vadd.f32 %v362, %v614
        %v676 = vadd.f32 %v363, %v616
        %v677 = vadd.f32 %v364, %v619
        %v678 = vadd.f32 %v365, %v621
        %v679 = vadd.f32 %v366, %v624
        %v680 = vadd.f32 %v367, %v626
        %v681 = vadd.f32 %v368, %v629
        %v682 = vadd.f32 %v369, %v631
        %v683 = vadd.f32 %v370, %v634
        %v684 = vadd.f32 %v371, %v636
        %v685 = vadd.f32 %v372, %v639
        %v686 = vadd.f32 %v373, %v641
        %v687 = vadd.f32 %v374, %v644
        %v688 = vadd.f32 %v375, %v646
        %v689 = vadd.f32 %v376, %v649
        %v690 = vadd.f32 %v377, %v651
        %v691 = vadd.f32 %v378, %v654
        %v692 = vadd.f32 %v379, %v656
        %v693 = vadd.f32 %v380, %v659
        %v694 = vadd.f32 %v381, %v661
        %695 = vst [vmem:[#allocation2] sm:$0xff] %v663
        %696 = vst [vmem:[#allocation2 + $0x8] sm:$0xff] %v664
        %697 = vst [vmem:[#allocation2 + $0x10] sm:$0xff] %v665
        %698 = vst [vmem:[#allocation2 + $0x18] sm:$0xff] %v666
        %699 = vst [vmem:[#allocation2 + $0x20] sm:$0xff] %v667
        %700 = vst [vmem:[#allocation2 + $0x28] sm:$0xff] %v668
        %701 = vst [vmem:[#allocation2 + $0x30] sm:$0xff] %v669
        %702 = vst [vmem:[#allocation2 + $0x38] sm:$0xff] %v670
        %703 = vst [vmem:[#allocation2 + $0x40] sm:$0xff] %v671
        %704 = vst [vmem:[#allocation2 + $0x48] sm:$0xff] %v672
        %705 = vst [vmem:[#allocation2 + $0x50] sm:$0xff] %v673
        %706 = vst [vmem:[#allocation2 + $0x58] sm:$0xff] %v674
        %707 = vst [vmem:[#allocation2 + $0x60] sm:$0xff] %v675
        %708 = vst [vmem:[#allocation2 + $0x68] sm:$0xff] %v676
        %709 = vst [vmem:[#allocation2 + $0x70] sm:$0xff] %v677
        %710 = vst [vmem:[#allocation2 + $0x78] sm:$0xff] %v678
        %711 = vst [vmem:[#allocation2 + $0x80] sm:$0xff] %v679
        %712 = vst [vmem:[#allocation2 + $0x88] sm:$0xff] %v680
        %713 = vst [vmem:[#allocation2 + $0x90] sm:$0xff] %v681
        %714 = vst [vmem:[#allocation2 + $0x98] sm:$0xff] %v682
        %715 = vst [vmem:[#allocation2 + $0xa0] sm:$0xff] %v683
        %716 = vst [vmem:[#allocation2 + $0xa8] sm:$0xff] %v684
        %717 = vst [vmem:[#allocation2 + $0xb0] sm:$0xff] %v685
        %718 = vst [vmem:[#allocation2 + $0xb8] sm:$0xff] %v686
        %719 = vst [vmem:[#allocation2 + $0xc0] sm:$0xff] %v687
        %720 = vst [vmem:[#allocation2 + $0xc8] sm:$0xff] %v688
        %721 = vst [vmem:[#allocation2 + $0xd0] sm:$0xff] %v689
        %722 = vst [vmem:[#allocation2 + $0xd8] sm:$0xff] %v690
        %723 = vst [vmem:[#allocation2 + $0xe0] sm:$0xff] %v691
        %724 = vst [vmem:[#allocation2 + $0xe8] sm:$0xff] %v692
        %725 = vst [vmem:[#allocation2 + $0xf0] sm:$0xff] %v693
        %726 = vst [vmem:[#allocation2 + $0xf8] sm:$0xff] %v694
        // Predicated region
        $region57: #{tpu_custom_call.1} parent=35 // pred_check
          %p727 = pneg %p314
        $region58: #{tpu_custom_call.1} parent=35 // pred_check_branch
          %729 = sbr.rel (%p727) target = $region60
        $region59: #{tpu_custom_call.1} parent=35 // pred_region
          %v730 = vld [vmem:[#allocation2] sm:$0xff]
          %v731 = vld [vmem:[#allocation2 + $0x8] sm:$0xff]
          %v732 = vld [vmem:[#allocation2 + $0x10] sm:$0xff]
          %v733 = vld [vmem:[#allocation2 + $0x18] sm:$0xff]
          %v734 = vld [vmem:[#allocation2 + $0x20] sm:$0xff]
          %v735 = vld [vmem:[#allocation2 + $0x28] sm:$0xff]
          %v736 = vld [vmem:[#allocation2 + $0x30] sm:$0xff]
          %v737 = vld [vmem:[#allocation2 + $0x38] sm:$0xff]
          %v738 = vld [vmem:[#allocation2 + $0x40] sm:$0xff]
          %v739 = vld [vmem:[#allocation2 + $0x48] sm:$0xff]
          %v740 = vld [vmem:[#allocation2 + $0x50] sm:$0xff]
          %v741 = vld [vmem:[#allocation2 + $0x58] sm:$0xff]
          %v742 = vld [vmem:[#allocation2 + $0x60] sm:$0xff]
          %v743 = vld [vmem:[#allocation2 + $0x68] sm:$0xff]
          %v744 = vld [vmem:[#allocation2 + $0x70] sm:$0xff]
          %v745 = vld [vmem:[#allocation2 + $0x78] sm:$0xff]
          %v746 = vld [vmem:[#allocation2 + $0x80] sm:$0xff]
          %v747 = vld [vmem:[#allocation2 + $0x88] sm:$0xff]
          %v748 = vld [vmem:[#allocation2 + $0x90] sm:$0xff]
          %v749 = vld [vmem:[#allocation2 + $0x98] sm:$0xff]
          %v750 = vld [vmem:[#allocation2 + $0xa0] sm:$0xff]
          %v751 = vld [vmem:[#allocation2 + $0xa8] sm:$0xff]
          %v752 = vld [vmem:[#allocation2 + $0xb0] sm:$0xff]
          %v753 = vld [vmem:[#allocation2 + $0xb8] sm:$0xff]
          %v754 = vld [vmem:[#allocation2 + $0xc0] sm:$0xff]
          %v755 = vld [vmem:[#allocation2 + $0xc8] sm:$0xff]
          %v756 = vld [vmem:[#allocation2 + $0xd0] sm:$0xff]
          %v757 = vld [vmem:[#allocation2 + $0xd8] sm:$0xff]
          %v758 = vld [vmem:[#allocation2 + $0xe0] sm:$0xff]
          %v759 = vld [vmem:[#allocation2 + $0xe8] sm:$0xff]
          %v760 = vld [vmem:[#allocation2 + $0xf0] sm:$0xff]
          %v761 = vld [vmem:[#allocation2 + $0xf8] sm:$0xff]
          %v762 = vld [vmem:[#allocation8] sm:$0x1]
          %v764 = vperm.slane %v762, 0
          %v766 = vmul.f32 %v730, %v764
          %v767 = vmul.f32 %v731, %v764
          %v768 = vmul.f32 %v732, %v764
          %v769 = vmul.f32 %v733, %v764
          %v770 = vmul.f32 %v734, %v764
          %v771 = vmul.f32 %v735, %v764
          %v772 = vmul.f32 %v736, %v764
          %v773 = vmul.f32 %v737, %v764
          %v774 = vmul.f32 %v738, %v764
          %v775 = vmul.f32 %v739, %v764
          %v776 = vmul.f32 %v740, %v764
          %v777 = vmul.f32 %v741, %v764
          %v778 = vmul.f32 %v742, %v764
          %v779 = vmul.f32 %v743, %v764
          %v780 = vmul.f32 %v744, %v764
          %v781 = vmul.f32 %v745, %v764
          %v782 = vmul.f32 %v746, %v764
          %v783 = vmul.f32 %v747, %v764
          %v784 = vmul.f32 %v748, %v764
          %v785 = vmul.f32 %v749, %v764
          %v786 = vmul.f32 %v750, %v764
          %v787 = vmul.f32 %v751, %v764
          %v788 = vmul.f32 %v752, %v764
          %v789 = vmul.f32 %v753, %v764
          %v790 = vmul.f32 %v754, %v764
          %v791 = vmul.f32 %v755, %v764
          %v792 = vmul.f32 %v756, %v764
          %v793 = vmul.f32 %v757, %v764
          %v794 = vmul.f32 %v758, %v764
          %v795 = vmul.f32 %v759, %v764
          %v796 = vmul.f32 %v760, %v764
          %v797 = vmul.f32 %v761, %v764
          %v798 = vld [vmem:[#allocation9] sm:$0x1]
          %v800 = vperm.slane %v798, 0
          %v802 = vadd.f32 %v766, %v800
          %v803 = vadd.f32 %v767, %v800
          %v804 = vadd.f32 %v768, %v800
          %v805 = vadd.f32 %v769, %v800
          %v806 = vadd.f32 %v770, %v800
          %v807 = vadd.f32 %v771, %v800
          %v808 = vadd.f32 %v772, %v800
          %v809 = vadd.f32 %v773, %v800
          %v810 = vadd.f32 %v774, %v800
          %v811 = vadd.f32 %v775, %v800
          %v812 = vadd.f32 %v776, %v800
          %v813 = vadd.f32 %v777, %v800
          %v814 = vadd.f32 %v778, %v800
          %v815 = vadd.f32 %v779, %v800
          %v816 = vadd.f32 %v780, %v800
          %v817 = vadd.f32 %v781, %v800
          %v818 = vadd.f32 %v782, %v800
          %v819 = vadd.f32 %v783, %v800
          %v820 = vadd.f32 %v784, %v800
          %v821 = vadd.f32 %v785, %v800
          %v822 = vadd.f32 %v786, %v800
          %v823 = vadd.f32 %v787, %v800
          %v824 = vadd.f32 %v788, %v800
          %v825 = vadd.f32 %v789, %v800
          %v826 = vadd.f32 %v790, %v800
          %v827 = vadd.f32 %v791, %v800
          %v828 = vadd.f32 %v792, %v800
          %v829 = vadd.f32 %v793, %v800
          %v830 = vadd.f32 %v794, %v800
          %v831 = vadd.f32 %v795, %v800
          %v832 = vadd.f32 %v796, %v800
          %v833 = vadd.f32 %v797, %v800
          %v834 = vmax.f32 %v802, 0.0
          %v835 = vmax.f32 %v803, 0.0
          %v836 = vmax.f32 %v804, 0.0
          %v837 = vmax.f32 %v805, 0.0
          %v838 = vmax.f32 %v806, 0.0
          %v839 = vmax.f32 %v807, 0.0
          %v840 = vmax.f32 %v808, 0.0
          %v841 = vmax.f32 %v809, 0.0
          %v842 = vmax.f32 %v810, 0.0
          %v843 = vmax.f32 %v811, 0.0
          %v844 = vmax.f32 %v812, 0.0
          %v845 = vmax.f32 %v813, 0.0
          %v846 = vmax.f32 %v814, 0.0
          %v847 = vmax.f32 %v815, 0.0
          %v848 = vmax.f32 %v816, 0.0
          %v849 = vmax.f32 %v817, 0.0
          %v850 = vmax.f32 %v818, 0.0
          %v851 = vmax.f32 %v819, 0.0
          %v852 = vmax.f32 %v820, 0.0
          %v853 = vmax.f32 %v821, 0.0
          %v854 = vmax.f32 %v822, 0.0
          %v855 = vmax.f32 %v823, 0.0
          %v856 = vmax.f32 %v824, 0.0
          %v857 = vmax.f32 %v825, 0.0
          %v858 = vmax.f32 %v826, 0.0
          %v859 = vmax.f32 %v827, 0.0
          %v860 = vmax.f32 %v828, 0.0
          %v861 = vmax.f32 %v829, 0.0
          %v862 = vmax.f32 %v830, 0.0
          %v863 = vmax.f32 %v831, 0.0
          %v864 = vmax.f32 %v832, 0.0
          %v865 = vmax.f32 %v833, 0.0
          %866 = vst [vmem:[%s310] sm:$0xff] %v834
          %867 = vst [vmem:[%s310 + $0x8] sm:$0xff] %v835
          %868 = vst [vmem:[%s310 + $0x10] sm:$0xff] %v836
          %869 = vst [vmem:[%s310 + $0x18] sm:$0xff] %v837
          %870 = vst [vmem:[%s310 + $0x20] sm:$0xff] %v838
          %871 = vst [vmem:[%s310 + $0x28] sm:$0xff] %v839
          %872 = vst [vmem:[%s310 + $0x30] sm:$0xff] %v840
          %873 = vst [vmem:[%s310 + $0x38] sm:$0xff] %v841
          %874 = vst [vmem:[%s310 + $0x40] sm:$0xff] %v842
          %875 = vst [vmem:[%s310 + $0x48] sm:$0xff] %v843
          %876 = vst [vmem:[%s310 + $0x50] sm:$0xff] %v844
          %877 = vst [vmem:[%s310 + $0x58] sm:$0xff] %v845
          %878 = vst [vmem:[%s310 + $0x60] sm:$0xff] %v846
          %879 = vst [vmem:[%s310 + $0x68] sm:$0xff] %v847
          %880 = vst [vmem:[%s310 + $0x70] sm:$0xff] %v848
          %881 = vst [vmem:[%s310 + $0x78] sm:$0xff] %v849
          %882 = vst [vmem:[%s310 + $0x80] sm:$0xff] %v850
          %883 = vst [vmem:[%s310 + $0x88] sm:$0xff] %v851
          %884 = vst [vmem:[%s310 + $0x90] sm:$0xff] %v852
          %885 = vst [vmem:[%s310 + $0x98] sm:$0xff] %v853
          %886 = vst [vmem:[%s310 + $0xa0] sm:$0xff] %v854
          %887 = vst [vmem:[%s310 + $0xa8] sm:$0xff] %v855
          %888 = vst [vmem:[%s310 + $0xb0] sm:$0xff] %v856
          %889 = vst [vmem:[%s310 + $0xb8] sm:$0xff] %v857
          %890 = vst [vmem:[%s310 + $0xc0] sm:$0xff] %v858
          %891 = vst [vmem:[%s310 + $0xc8] sm:$0xff] %v859
          %892 = vst [vmem:[%s310 + $0xd0] sm:$0xff] %v860
          %893 = vst [vmem:[%s310 + $0xd8] sm:$0xff] %v861
          %894 = vst [vmem:[%s310 + $0xe0] sm:$0xff] %v862
          %895 = vst [vmem:[%s310 + $0xe8] sm:$0xff] %v863
          %896 = vst [vmem:[%s310 + $0xf0] sm:$0xff] %v864
          %897 = vst [vmem:[%s310 + $0xf8] sm:$0xff] %v865
        $region60: #{tpu_custom_call.1} parent=35 // pred_fallthru
          _
        %s898 = sand.u32 %s160, 1
        %s899 = scalar_lea.sflag [#allocation5], %s898
        %s900 = sand.u32 %s160, 1
        %s901 = smul.addr %s900, 256
        %s902 = scalar_lea.vmem [#allocation11], %s901
        // Predicated region
        $region61: #{tpu_custom_call.1} parent=35 // pred_check
          %p903 = pneg %p170
        $region62: #{tpu_custom_call.1} parent=35 // pred_check_branch
          %905 = sbr.rel (%p903) target = $region64
        $region63: #{tpu_custom_call.1} parent=35 // pred_region
          %s906 = smul.u32 32, %s28
          %908 = vsyncadd %s899, 0
          %s909 = sadd.s32 %s29, %s906
          %s910 = smul.addr %s909, 8
          %s911 = scalar_lea.hbm %s4, %s910
          %s912 = sshll.u32 %s902, 4
          %s913 = int_to_ptr.vmem [resolvable:$true] %s912
          %s914 = sshll.u32 %s911, 4
          %s915 = int_to_ptr.hbm [resolvable:$true] %s914
          %920 = dma.vmem_to_hbm [thread:$0]  %s913, 4096, %s915, %s899, 128, 128, 8
        $region64: #{tpu_custom_call.1} parent=35 // pred_fallthru
          _
      $region36: #{tpu_custom_call.1} parent=5 // pred_fallthru
        _
      %p921 = scmp.le.s32.totalorder 2, %s18
      // Predicated region
      $region65: #{tpu_custom_call.1} parent=5 // pred_check
        %p922 = pneg %p921
      $region66: #{tpu_custom_call.1} parent=5 // pred_check_branch
        %924 = sbr.rel (%p922) target = $region68
      $region67: #{tpu_custom_call.1} parent=5 // pred_region
        %s925 = ssub.s32 %s18, 2
        // Predicated region
        $region69: #{tpu_custom_call.1} parent=67 // pred_check
          %p926 = pneg %p176
        $region70: #{tpu_custom_call.1} parent=67 // pred_check_branch
          %928 = sbr.rel (%p926) target = $region72
        $region71: #{tpu_custom_call.1} parent=67 // pred_region
          %s929 = sand.u32 %s161, 1
          %s930 = scalar_lea.sflag [#allocation5], %s929
          %s931 = sand.u32 %s161, 1
          %s932 = smul.addr %s931, 256
          %s933 = scalar_lea.vmem [#allocation11], %s932
          %935 = dma.done %s930, 4096
        $region72: #{tpu_custom_call.1} parent=67 // pred_fallthru
          _
      $region68: #{tpu_custom_call.1} parent=5 // pred_fallthru
        _
    $region6: #{tpu_custom_call.1} parent=1 // loop_footer
      %s22 = sadd.s32 1, %s18
    $region7: #{tpu_custom_call.1} parent=1 // loop_footer_branch
      %17 = sbr.rel target = $region3
    $region8: #{tpu_custom_call.1} parent=1 // loop_exit
      _
    %936 = vsyncpa [#allocation4], 1
    %s937 = scalar_lea.sflag [#allocation4], 1
    %938 = vsyncpa %s937, 1
    %939 = vsyncpa [#allocation7], 1
    %940 = vsyncpa [#allocation10], 1
    %941 = vsyncpa [#allocation5], 1
    %s942 = scalar_lea.sflag [#allocation5], 1
    %943 = vsyncpa %s942, 1

</llo_original>
